<compile_context>
chip_gen: v7x
topology: tpu7x:2x2x1
jax: 0.10.0
libtpu: 0.0.40
codegen_flags: <defaults>
</compile_context>

<pallas_src>
import functools
import math

import jax
import jax.numpy as jnp
from jax.experimental import pallas as pl
from jax.experimental.pallas import tpu as pltpu


# --------------------------------------------------------------------------
# Config: the ClapAudioConfig fields ClapAudioPatchEmbed actually uses
# --------------------------------------------------------------------------
class Config:
    spec_size = 16                     # toy spectrogram size (real CLAP: 256)
    patch_size = 4
    patch_stride = 4
    patch_embed_input_channels = 1
    patch_embeds_hidden_size = 96      # real CLAP value
    flatten_patch_embeds = True
    enable_patch_layer_norm = True
    enable_fusion = False              # fusion branch not supported (see TODO)
    layer_norm_eps = 1e-5              # torch nn.LayerNorm default


# --------------------------------------------------------------------------
# Pallas kernel: rows @ W + b, then LayerNorm over the hidden dim
# --------------------------------------------------------------------------
def _patch_embed_kernel(x_ref, w_ref, p_ref, o_ref, *, eps, do_norm):
    # x_ref: (tile_m, K) im2col rows
    # w_ref: (K, N) projection weight
    # p_ref: (8, N) packed small params: row0=proj bias, row1=LN gamma, row2=LN beta
    y = jnp.dot(x_ref[...], w_ref[...], preferred_element_type=jnp.float32)
    p = p_ref[...].astype(jnp.float32)
    y = y + p[0:1, :]
    if do_norm:
        mu = jnp.mean(y, axis=-1, keepdims=True)
        var = jnp.mean((y - mu) ** 2, axis=-1, keepdims=True)   # biased, like torch
        y = (y - mu) * jax.lax.rsqrt(var + eps) * p[1:2, :] + p[2:3, :]
    o_ref[...] = y.astype(o_ref.dtype)


# --------------------------------------------------------------------------
# Wrapper helpers
# --------------------------------------------------------------------------
_MAX_TILE_ROWS = 4096     # ~3.7 MiB double-buffered at K=16, N=96 (f32)
_MIN_STEPS = 4            # keeps the parallel axis 2-way splittable on v7x
                          # with >=2 steps/core; irrelevant on 1-TC v5e/v6e


def _pick_tile_m(m):
    """Largest multiple-of-8 divisor of m (capped at _MAX_TILE_ROWS) that still
    yields >= _MIN_STEPS grid steps; if m is too small for that, fall back to
    the largest divisor (possibly the whole slab as a single step)."""
    divisors = [t for t in range(8, min(m, _MAX_TILE_ROWS) + 1, 8) if m % t == 0]
    if not divisors:
        return m                                   # whole slab (block == full dim)
    for t in sorted(divisors, reverse=True):
        if m // t >= _MIN_STEPS:
            return t
    return max(divisors)


def _im2col(x, patch_size, patch_stride):
    """Non-overlapping patch extraction as a lane-dense (B*Gh*Gw, C*ph*pw) slab
    whose last-axis ordering matches torch Conv2d weight flattening (C,kh,kw).
    Single reshape+transpose (one fused XLA copy)."""
    B, C, H, W = x.shape
    ph, pw = patch_size
    sh, sw = patch_stride
    if ph != sh or pw != sw:
        # TODO(synk): overlapping-conv (patch_size != patch_stride) path needs
        # a real padded im2col; not required for any CLAP config.
        raise ValueError("patch_size must equal patch_stride for this kernel")
    Gh, Gw = H // sh, W // sw
    patches = x.reshape(B, C, Gh, ph, Gw, pw).transpose(0, 2, 4, 1, 3, 5)
    return patches.reshape(B * Gh * Gw, C * ph * pw), Gh, Gw


# --------------------------------------------------------------------------
# ClapAudioPatchEmbed.forward (enable_fusion=False path)
# --------------------------------------------------------------------------
def clap_audio_patch_embed(x, params, cfg, out_dtype=None):
    """x: (B, C, H, W) float32.  Returns (B, num_patches, hidden) when
    flatten_patch_embeds=True (the standard CLAP configuration)."""
    B, C, H, W = x.shape
    if H != cfg.spec_size or W != cfg.spec_size:
        raise ValueError(
            f"Input audio size ({H}*{W}) doesn't match model "
            f"({cfg.spec_size}*{cfg.spec_size}).")
    # TODO(synk): enable_fusion branch (mel_conv2d + ClapAudioAFFBlock with
    # data-dependent is_longer_idx batch selection) is not implemented here.
    if cfg.enable_fusion:
        raise NotImplementedError("fusion path not supported in this kernel")

    ph = pw = cfg.patch_size
    sh = sw = cfg.patch_stride
    out_dtype = x.dtype if out_dtype is None else out_dtype

    patches, Gh, Gw = _im2col(x, (ph, pw), (sh, sw))   # (M, K)
    M, K = patches.shape
    N = cfg.patch_embeds_hidden_size

    # Conv2d weight (N, C, ph, pw) -> matmul layout (K, N); small params packed
    # into one (8, N) slab: row0 = proj bias, row1 = LN gamma, row2 = LN beta.
    w2d = params["proj_w"].reshape(N, K).T
    small = jnp.zeros((8, N), jnp.float32)
    small = small.at[0].set(params["proj_b"])
    small = small.at[1].set(params["ln_g"])
    small = small.at[2].set(params["ln_b"])

    tile_m = _pick_tile_m(M)
    grid = (pl.cdiv(M, tile_m),)

    do_norm = cfg.enable_patch_layer_norm and cfg.flatten_patch_embeds
    kernel = functools.partial(_patch_embed_kernel, eps=cfg.layer_norm_eps,
                               do_norm=do_norm)

    # Estimated double-buffered VMEM footprint; only raise the scoped limit if
    # a configuration would actually exceed the smallest (v5e, 16 MiB) default.
    est_bytes = 2 * tile_m * (K + N) * 4 + K * N * 4 + 8 * N * 4
    cp_kwargs = dict(dimension_semantics=("parallel",))
    if est_bytes > 12 * 1024 * 1024:
        cp_kwargs["vmem_limit_bytes"] = min(2 * est_bytes, 48 * 1024 * 1024)

    out2d = pl.pallas_call(
        kernel,
        out_shape=jax.ShapeDtypeStruct((M, N), out_dtype),
        grid=grid,
        in_specs=[
            pl.BlockSpec((tile_m, K), lambda i: (i, 0)),   # im2col rows
            pl.BlockSpec((K, N), lambda i: (0, 0)),        # projection weight
            pl.BlockSpec((8, N), lambda i: (0, 0)),        # packed bias/gamma/beta
        ],
        out_specs=pl.BlockSpec((tile_m, N), lambda i: (i, 0)),
        compiler_params=pltpu.CompilerParams(**cp_kwargs),
    )(patches, w2d, small)

    if cfg.flatten_patch_embeds:
        return out2d.reshape(B, Gh * Gw, N)
    # TODO(synk): flatten=False keeps NCHW layout in torch and applies LayerNorm
    # over the last spatial dim; that layout is returned here without the norm.
    return out2d.reshape(B, Gh, Gw, N).transpose(0, 3, 1, 2)


# --------------------------------------------------------------------------
# Deterministic parameter init (matches torch Conv2d default init ranges)
# --------------------------------------------------------------------------
def init_params(key, cfg):
    C = cfg.patch_embed_input_channels
    N = cfg.patch_embeds_hidden_size
    ph = pw = cfg.patch_size
    k1, k2 = jax.random.split(key)
    fan_in = C * ph * pw
    bound = 1.0 / math.sqrt(fan_in)
    proj_w = jax.random.uniform(k1, (N, C, ph, pw), jnp.float32, -bound, bound)
    proj_b = jax.random.uniform(k2, (N,), jnp.float32, -bound, bound)
    return dict(
        proj_w=proj_w, proj_b=proj_b,
        ln_g=jnp.ones((N,), jnp.float32), ln_b=jnp.zeros((N,), jnp.float32),
    )


# --------------------------------------------------------------------------
# Pure-JAX reference (XLA conv + LayerNorm) for a runtime correctness check
# --------------------------------------------------------------------------
def _reference(x, params, cfg):
    ph = pw = cfg.patch_size
    sh = sw = cfg.patch_stride
    pad_h, pad_w = (ph - sh) // 2, (pw - sw) // 2
    y = jax.lax.conv_general_dilated(
        x, params["proj_w"], window_strides=(sh, sw),
        padding=[(pad_h, pad_h), (pad_w, pad_w)],
        dimension_numbers=("NCHW", "OIHW", "NCHW"))
    y = y + params["proj_b"][None, :, None, None]
    B, N, Gh, Gw = y.shape
    y = y.reshape(B, N, Gh * Gw).transpose(0, 2, 1)        # flatten(2).transpose(1,2)
    mu = y.mean(-1, keepdims=True)
    var = ((y - mu) ** 2).mean(-1, keepdims=True)
    return (y - mu) / jnp.sqrt(var + cfg.layer_norm_eps) * params["ln_g"] + params["ln_b"]


# --------------------------------------------------------------------------
if __name__ == "__main__":
    cfg = Config()
    B = 2

    key = jax.random.PRNGKey(0)
    kx, kp = jax.random.split(key)

    x = jax.random.normal(
        kx, (B, cfg.patch_embed_input_channels, cfg.spec_size, cfg.spec_size),
        jnp.float32)
    params = init_params(kp, cfg)

    out = clap_audio_patch_embed(x, params, cfg)
    out = jax.block_until_ready(out)

    num_patches = (cfg.spec_size // cfg.patch_stride) ** 2
    assert out.shape == (B, num_patches, cfg.patch_embeds_hidden_size)
    assert bool(jnp.all(jnp.isfinite(out)))

    ref = _reference(x, params, cfg)
    assert bool(jnp.allclose(out, ref, atol=1e-4, rtol=1e-4))

    print("KERNEL_OK")
</pallas_src>

<mosaic_0001>
module attributes {stable_mosaic.version = 11 : i64} {
  func.func @_patch_embed_kernel(%arg0: i32, %arg1: memref<8x16xf32, #tpu.memory_space<vmem>>, %arg2: memref<16x96xf32, #tpu.memory_space<vmem>>, %arg3: memref<8x96xf32, #tpu.memory_space<vmem>>, %arg4: memref<8x96xf32, #tpu.memory_space<vmem>>) attributes {dimension_semantics = [#tpu.dimension_semantics<parallel>], iteration_bounds = array<i64: 4>, scalar_prefetch = 0 : i64, scratch_operands = 0 : i64, tpu.core_type = #tpu.core_type<tc>, window_params = [{transform_indices = @transform_0, window_bounds = array<i64: 8, 16>}, {pipeline_mode = #tpu.pipeline_mode<synchronous>, transform_indices = @transform_1, window_bounds = array<i64: 16, 96>}, {pipeline_mode = #tpu.pipeline_mode<synchronous>, transform_indices = @transform_2, window_bounds = array<i64: 8, 96>}, {transform_indices = @transform_3, window_bounds = array<i64: 8, 96>}]} {
    %c0 = arith.constant 0 : index
    %c0_0 = arith.constant 0 : index
    %0 = vector.load %arg1[%c0, %c0_0] : memref<8x16xf32, #tpu.memory_space<vmem>>, vector<8x16xf32>
    %c0_1 = arith.constant 0 : index
    %c0_2 = arith.constant 0 : index
    %1 = vector.load %arg2[%c0_1, %c0_2] : memref<16x96xf32, #tpu.memory_space<vmem>>, vector<16x96xf32>
    %cst = arith.constant dense<0.000000e+00> : vector<8x96xf32>
    %2 = tpu.matmul %0, %1, %cst {dimension_numbers = #tpu.dot_dimension_numbers<[1], [0], [0], [1], [0, 0, 1, 1], [], []>} : vector<8x16xf32>, vector<16x96xf32>, vector<8x96xf32> -> vector<8x96xf32>
    %c0_3 = arith.constant 0 : index
    %c0_4 = arith.constant 0 : index
    %3 = vector.load %arg3[%c0_3, %c0_4] : memref<8x96xf32, #tpu.memory_space<vmem>>, vector<8x96xf32>
    %4 = vector.extract_strided_slice %3 {offsets = [0, 0], sizes = [1, 96], strides = [1, 1]} : vector<8x96xf32> to vector<1x96xf32>
    %5 = vector.broadcast %4 : vector<1x96xf32> to vector<8x96xf32>
    %6 = arith.addf %2, %5 : vector<8x96xf32>
    %cst_5 = arith.constant dense<0.000000e+00> : vector<8xf32>
    %7 = vector.multi_reduction <add>, %6, %cst_5 [1] : vector<8x96xf32> to vector<8xf32>
    %8 = vector.shape_cast %7 : vector<8xf32> to vector<8x1xf32>
    %cst_6 = arith.constant 9.600000e+01 : f32
    %9 = vector.broadcast %cst_6 : f32 to vector<8x1xf32>
    %10 = arith.divf %8, %9 : vector<8x1xf32>
    %11 = vector.broadcast %10 : vector<8x1xf32> to vector<8x96xf32>
    %12 = arith.subf %6, %11 : vector<8x96xf32>
    %13 = arith.mulf %12, %12 : vector<8x96xf32>
    %cst_7 = arith.constant dense<0.000000e+00> : vector<8xf32>
    %14 = vector.multi_reduction <add>, %13, %cst_7 [1] : vector<8x96xf32> to vector<8xf32>
    %15 = vector.shape_cast %14 : vector<8xf32> to vector<8x1xf32>
    %cst_8 = arith.constant 9.600000e+01 : f32
    %16 = vector.broadcast %cst_8 : f32 to vector<8x1xf32>
    %17 = arith.divf %15, %16 : vector<8x1xf32>
    %18 = vector.broadcast %10 : vector<8x1xf32> to vector<8x96xf32>
    %19 = arith.subf %6, %18 : vector<8x96xf32>
    %cst_9 = arith.constant 9.99999974E-6 : f32
    %20 = vector.broadcast %cst_9 : f32 to vector<8x1xf32>
    %21 = arith.addf %17, %20 : vector<8x1xf32>
    %22 = math.rsqrt %21 : vector<8x1xf32>
    %23 = vector.broadcast %22 : vector<8x1xf32> to vector<8x96xf32>
    %24 = arith.mulf %19, %23 : vector<8x96xf32>
    %25 = vector.extract_strided_slice %3 {offsets = [1, 0], sizes = [1, 96], strides = [1, 1]} : vector<8x96xf32> to vector<1x96xf32>
    %26 = vector.broadcast %25 : vector<1x96xf32> to vector<8x96xf32>
    %27 = arith.mulf %24, %26 : vector<8x96xf32>
    %28 = vector.extract_strided_slice %3 {offsets = [2, 0], sizes = [1, 96], strides = [1, 1]} : vector<8x96xf32> to vector<1x96xf32>
    %29 = vector.broadcast %28 : vector<1x96xf32> to vector<8x96xf32>
    %30 = arith.addf %27, %29 : vector<8x96xf32>
    %c0_10 = arith.constant 0 : index
    %c0_11 = arith.constant 0 : index
    %31 = vector.load %arg4[%c0_10, %c0_11] : memref<8x96xf32, #tpu.memory_space<vmem>>, vector<8x96xf32>
    tpu.vector_store %arg4[%c0_10, %c0_11], %30 {strides = array<i32>} : memref<8x96xf32, #tpu.memory_space<vmem>>, vector<8x96xf32>,
    return
  }
  func.func @transform_0(%arg0: i32) -> (i32, i32) {
    %c0_i32 = arith.constant 0 : i32
    %c0_i32_0 = arith.constant 0 : i32
    return %arg0, %c0_i32 : i32, i32
  }
  func.func @transform_1(%arg0: i32) -> (i32, i32) {
    %c0_i32 = arith.constant 0 : i32
    %c0_i32_0 = arith.constant 0 : i32
    %c0_i32_1 = arith.constant 0 : i32
    return %c0_i32, %c0_i32_0 : i32, i32
  }
  func.func @transform_2(%arg0: i32) -> (i32, i32) {
    %c0_i32 = arith.constant 0 : i32
    %c0_i32_0 = arith.constant 0 : i32
    %c0_i32_1 = arith.constant 0 : i32
    return %c0_i32, %c0_i32_0 : i32, i32
  }
  func.func @transform_3(%arg0: i32) -> (i32, i32) {
    %c0_i32 = arith.constant 0 : i32
    %c0_i32_0 = arith.constant 0 : i32
    return %arg0, %c0_i32 : i32, i32
  }
}

</mosaic_0001>

<llo_original>
// kernel: tpu_custom_call.1
$region0: #{tpu_custom_call.1}
  #allocation0 [shape = 'u32[]', space=smem, size = 0x4, offset = 0x4, fixed_abs, tag = 'smem constant byte address 0x4 - core index']
  #allocation1 [shape = 'u32[144,128]{1,0:T(1,128)}', space=vmem, size = 0x12000, scoped, tag = 'internal scratch']
  %s0 = inlined_call_operand.vmem [shape: f32[32,16], index: 0, kind: input, shape index: {}]
  %s1 = inlined_call_operand.vmem [shape: f32[16,96], index: 1, kind: input, shape index: {}]
  %s2 = inlined_call_operand.vmem [shape: f32[8,96], index: 2, kind: input, shape index: {}]
  %s3 = inlined_call_operand.hbm [shape: f32[32,96], index: 3, kind: output, shape index: {}]
  %s4 = sld [smem:[#allocation0]]
  $region45: #{tpu_custom_call.1} parent=0
    _
  %s6 = ssub.s32 1, %s4
  %s7 = scalar_select 0, %s6, %s4
  $region1: #{tpu_custom_call.1} parent=0
    #allocation2 [shape = 'u8[8192]{0}', space=vmem, size = 0x2000, scoped, tag = 'output window, operand 0']
    #allocation3 [shape = 's32[2]{0}', space=sflag, size = 0x8, scoped, tag = 'scoped memory for tpu_custom_call.1']
    %8 = vsyncpa [#allocation3], 0
    %s9 = scalar_lea.sflag [#allocation3], 1
    %10 = vsyncpa %s9, 0
    loop: start=0, step=1, limit=6
    $region2: #{tpu_custom_call.1} parent=1 // loop_pre_header
      _
    $region3: #{tpu_custom_call.1} parent=1 // loop_header
      %s12 = sphi 0, %s16
      %p13 = scmp.ge.s32.totalorder %s12, 6
      %s22 = sphi 0, %s24
      %s25 = sphi 0, %s22
      %s26 = sphi 0, %s25
      %s42 = sphi 0, %s26
      %s46 = sphi 0, %s46
      %s48 = sphi 0, %s46
      %s49 = sphi 0, %s48
      %s63 = sphi 0, %s49
      %s67 = sphi 0, %s67
      %s69 = sphi 0, %s67
      %s70 = sphi 0, %s69
      %s84 = sphi 0, %s70
      %s90 = sphi 0, %s92
      %s93 = sphi 0, %s90
      %s94 = sphi 0, %s93
      %s110 = sphi 0, %s94
    $region4: #{tpu_custom_call.1} parent=1 // loop_header_branch
      %15 = sbr.rel (%p13) target = $region8
    $region5: #{tpu_custom_call.1} parent=1 // loop_body
      %s17 = ssub.s32 %s12, 1
      %s18 = ssub.s32 %s12, 2
      %s19 = sadd.s32 %s12, 1
      %s20 = ssub.s32 %s12, %s19
      %p21 = scmp.eq.s32.totalorder %s20, 0
      %s23 = sadd.s32 %s22, 1
      %s24 = scalar_select %p21, %s22, %s23
      %p27 = pneg %p21
      %p28 = scmp.eq.s32.totalorder %s12, 3
      %p29 = por %p27, %p28
      %p30 = scmp.ne.s32.totalorder %s22, %s25
      %p31 = scmp.eq.s32.totalorder %s12, 0
      %p32 = por %p30, %p31
      %p33 = scmp.ne.s32.totalorder %s22, %s25
      %p34 = scmp.eq.s32.totalorder %s17, 3
      %p35 = por %p33, %p34
      %p36 = scmp.ne.s32.totalorder %s25, %s26
      %p37 = scmp.eq.s32.totalorder %s17, 0
      %p38 = por %p36, %p37
      %p39 = scmp.ne.s32.totalorder %s25, %s26
      %p40 = scmp.eq.s32.totalorder %s18, 3
      %p41 = por %p39, %p40
      %p43 = scmp.ne.s32.totalorder %s26, %s42
      %p44 = scmp.eq.s32.totalorder %s18, 0
      %p45 = por %p43, %p44
      %s47 = sadd.s32 %s46, 1
      %p50 = scmp.eq.s32.totalorder %s12, 3
      %p51 = scmp.ne.s32.totalorder %s46, %s48
      %p52 = scmp.eq.s32.totalorder %s12, 0
      %p53 = por %p51, %p52
      %p54 = scmp.ne.s32.totalorder %s46, %s48
      %p55 = scmp.eq.s32.totalorder %s17, 3
      %p56 = por %p54, %p55
      %p57 = scmp.ne.s32.totalorder %s48, %s49
      %p58 = scmp.eq.s32.totalorder %s17, 0
      %p59 = por %p57, %p58
      %p60 = scmp.ne.s32.totalorder %s48, %s49
      %p61 = scmp.eq.s32.totalorder %s18, 3
      %p62 = por %p60, %p61
      %p64 = scmp.ne.s32.totalorder %s49, %s63
      %p65 = scmp.eq.s32.totalorder %s18, 0
      %p66 = por %p64, %p65
      %s68 = sadd.s32 %s67, 1
      %p71 = scmp.eq.s32.totalorder %s12, 3
      %p72 = scmp.ne.s32.totalorder %s67, %s69
      %p73 = scmp.eq.s32.totalorder %s12, 0
      %p74 = por %p72, %p73
      %p75 = scmp.ne.s32.totalorder %s67, %s69
      %p76 = scmp.eq.s32.totalorder %s17, 3
      %p77 = por %p75, %p76
      %p78 = scmp.ne.s32.totalorder %s69, %s70
      %p79 = scmp.eq.s32.totalorder %s17, 0
      %p80 = por %p78, %p79
      %p81 = scmp.ne.s32.totalorder %s69, %s70
      %p82 = scmp.eq.s32.totalorder %s18, 3
      %p83 = por %p81, %p82
      %p85 = scmp.ne.s32.totalorder %s70, %s84
      %p86 = scmp.eq.s32.totalorder %s18, 0
      %p87 = por %p85, %p86
      %s88 = ssub.s32 %s12, %s19
      %p89 = scmp.eq.s32.totalorder %s88, 0
      %s91 = sadd.s32 %s90, 1
      %s92 = scalar_select %p89, %s90, %s91
      %p95 = pneg %p89
      %p96 = scmp.eq.s32.totalorder %s12, 3
      %p97 = por %p95, %p96
      %p98 = scmp.ne.s32.totalorder %s90, %s93
      %p99 = scmp.eq.s32.totalorder %s12, 0
      %p100 = por %p98, %p99
      %p101 = scmp.ne.s32.totalorder %s90, %s93
      %p102 = scmp.eq.s32.totalorder %s17, 3
      %p103 = por %p101, %p102
      %p104 = scmp.ne.s32.totalorder %s93, %s94
      %p105 = scmp.eq.s32.totalorder %s17, 0
      %p106 = por %p104, %p105
      %p107 = scmp.ne.s32.totalorder %s93, %s94
      %p108 = scmp.eq.s32.totalorder %s18, 3
      %p109 = por %p107, %p108
      %p111 = scmp.ne.s32.totalorder %s94, %s110
      %p112 = scmp.eq.s32.totalorder %s18, 0
      %p113 = por %p111, %p112
      %p114 = scmp.le.s32.totalorder 1, %s12
      %p115 = scmp.lt.s32.totalorder %s12, 5
      %p116 = pnand %p114, %p115
      %p117 = pneg %p116
      // Predicated region
      $region9: #{tpu_custom_call.1} parent=5 // pred_check
        _
      $region10: #{tpu_custom_call.1} parent=5 // pred_check_branch
        %119 = sbr.rel (%p116) target = $region12
      $region11: #{tpu_custom_call.1} parent=5 // pred_region
        %s120 = ssub.s32 %s12, 1
        // Predicated region
        $region13: #{tpu_custom_call.1} parent=11 // pred_check
          %p121 = pneg %p59
        $region14: #{tpu_custom_call.1} parent=11 // pred_check_branch
          %123 = sbr.rel (%p121) target = $region16
        $region15: #{tpu_custom_call.1} parent=11 // pred_region
          _
        $region16: #{tpu_custom_call.1} parent=11 // pred_fallthru
          _
        // Predicated region
        $region17: #{tpu_custom_call.1} parent=11 // pred_check
          %p124 = pneg %p80
        $region18: #{tpu_custom_call.1} parent=11 // pred_check_branch
          %126 = sbr.rel (%p124) target = $region20
        $region19: #{tpu_custom_call.1} parent=11 // pred_region
          _
        $region20: #{tpu_custom_call.1} parent=11 // pred_fallthru
          _
      $region12: #{tpu_custom_call.1} parent=5 // pred_fallthru
        _
      %p127 = scmp.lt.s32.totalorder %s12, 4
      // Predicated region
      $region21: #{tpu_custom_call.1} parent=5 // pred_check
        %p128 = pneg %p127
      $region22: #{tpu_custom_call.1} parent=5 // pred_check_branch
        %130 = sbr.rel (%p128) target = $region24
      $region23: #{tpu_custom_call.1} parent=5 // pred_region
        // Predicated region
        $region25: #{tpu_custom_call.1} parent=23 // pred_check
          %p131 = pneg %p32
        $region26: #{tpu_custom_call.1} parent=23 // pred_check_branch
          %133 = sbr.rel (%p131) target = $region28
        $region27: #{tpu_custom_call.1} parent=23 // pred_region
          %p134 = scmp.lt.s32.totalorder %s12, 3
          %s135 = scalar_select %p134, %s12, 3
          %s136 = smul.addr %s135, 8
          %s137 = scalar_lea.vmem %s0, %s136
        $region28: #{tpu_custom_call.1} parent=23 // pred_fallthru
          _
      $region24: #{tpu_custom_call.1} parent=5 // pred_fallthru
        _
      %p138 = scmp.le.s32.totalorder 1, %s12
      %p139 = scmp.lt.s32.totalorder %s12, 5
      %p140 = pnand %p138, %p139
      %p141 = pneg %p140
      // Predicated region
      $region29: #{tpu_custom_call.1} parent=5 // pred_check
        _
      $region30: #{tpu_custom_call.1} parent=5 // pred_check_branch
        %143 = sbr.rel (%p140) target = $region32
      $region31: #{tpu_custom_call.1} parent=5 // pred_region
        %s144 = ssub.s32 %s12, 1
        %p145 = scmp.lt.s32.totalorder %s17, 3
        %s146 = scalar_select %p145, %s17, 3
        %s147 = smul.addr %s146, 8
        %s148 = scalar_lea.vmem %s0, %s147
        %p149 = pneg %p38
        %p150 = pneg %p35
        %p151 = pneg %p59
        %p152 = pneg %p56
        %p153 = pneg %p80
        %p154 = pneg %p77
        %p155 = pneg %p106
        %p156 = pneg %p103
        %s157 = sand.u32 %s93, 1
        %s158 = scalar_lea.sflag [#allocation3], %s157
        %s159 = sand.u32 %s93, 1
        %s160 = smul.addr %s159, 8
        %s161 = scalar_lea.vmem [#allocation2], %s160
        %p162 = scmp.lt.s32.totalorder %s17, 3
        %s163 = scalar_select %p162, %s17, 3
        %s164 = smul.addr %s163, 8
        %s165 = scalar_lea.vmem %s0, %s164
        %v166 = vld [vmem:[%s165] sm:$0xff]
        %v167 = vld [vmem:[%s1] sm:$0xff]
        %v168 = vld [vmem:[%s1 + $0x8] sm:$0xff]
        %v169 = vld [vmem:[%s2] sm:$0xff]
        %v170 = vlaneseq
        %v171 = vshrl.u32 %v170, 7
        %v172 = vsub.s32 0, %v171
        %v173 = vrot.slane %v169, %v172
        %vm174 = vcmask 130048
        %v176 = vsel %vm174, %v166, 0
        %178 = vmatprep.subr.mxu0 0.0
        %179 = vmatpush1.msra.mxu0 %v167
        %180 = vmatprep.subr.mxu0 0.0
        %181 = vmatpush1.msra.mxu0 %v168
        %182 = vmatprep.subr.mxu0 0.0
        %183 = vmatpush1.msra.mxu0 0.0
        %184 = vmatprep.subr.mxu0 0.0
        %185 = vmatpush1.msra.mxu0 0.0
        %186 = vmatprep.subr.mxu0 0.0
        %187 = vmatpush1.msra.mxu0 0.0
        %188 = vmatprep.subr.mxu0 0.0
        %189 = vmatpush1.msra.mxu0 0.0
        %190 = vmatprep.subr.mxu0 0.0
        %191 = vmatpush1.msra.mxu0 0.0
        %192 = vmatprep.subr.mxu0 0.0
        %193 = vmatpush1.msra.mxu0 0.0
        %194 = vmatprep.subr.mxu0 0.0
        %195 = vmatpush1.msra.mxu0 0.0
        %196 = vmatprep.subr.mxu0 0.0
        %197 = vmatpush1.msra.mxu0 0.0
        %198 = vmatprep.subr.mxu0 0.0
        %199 = vmatpush1.msra.mxu0 0.0
        %200 = vmatprep.subr.mxu0 0.0
        %201 = vmatpush1.msra.mxu0 0.0
        %202 = vmatprep.subr.mxu0 0.0
        %203 = vmatpush1.msra.mxu0 0.0
        %204 = vmatprep.subr.mxu0 0.0
        %205 = vmatpush1.msra.mxu0 0.0
        %206 = vmatprep.subr.mxu0 0.0
        %207 = vmatpush1.msra.mxu0 0.0
        %208 = vmatprep.subr.mxu0 0.0
        %209 = vmatpush1.msra.mxu0 0.0
        %210 = vmatprep.subr.mxu0 0.0
        %211 = vmatpush1.msra.mxu0 0.0
        %212 = vmatprep.subr.mxu0 0.0
        %213 = vmatpush1.msra.mxu0 0.0
        %214 = vmatprep.subr.mxu0 0.0
        %215 = vmatpush1.msra.mxu0 0.0
        %216 = vmatprep.subr.mxu0 0.0
        %217 = vmatpush1.msra.mxu0 0.0
        %218 = vmatprep.subr.mxu0 0.0
        %219 = vmatpush1.msra.mxu0 0.0
        %220 = vmatprep.subr.mxu0 0.0
        %221 = vmatpush1.msra.mxu0 0.0
        %222 = vmatprep.subr.mxu0 0.0
        %223 = vmatpush1.msra.mxu0 0.0
        %224 = vmatprep.subr.mxu0 0.0
        %225 = vmatpush1.msra.mxu0 0.0
        %226 = vmatprep.subr.mxu0 0.0
        %227 = vmatpush1.msra.mxu0 0.0
        %228 = vmatprep.subr.mxu0 0.0
        %229 = vmatpush1.msra.mxu0 0.0
        %230 = vmatprep.subr.mxu0 0.0
        %231 = vmatpush1.msra.mxu0 0.0
        %232 = vmatprep.subr.mxu0 0.0
        %233 = vmatpush1.msra.mxu0 0.0
        %234 = vmatprep.subr.mxu0 0.0
        %235 = vmatpush1.msra.mxu0 0.0
        %236 = vmatprep.subr.mxu0 0.0
        %237 = vmatpush1.msra.mxu0 0.0
        %238 = vmatprep.subr.mxu0 0.0
        %239 = vmatpush1.msra.mxu0 0.0
        %240 = vmatprep.subr.mxu0 0.0
        %241 = vmatpush1.msra.mxu0 0.0
        %242 = vmatprep.mubr.f32.mxu0 0.0
        %243 = vmatmul.mubr.f32.gmra.mrb[0].mxu0 %v176
        %v244 = vpop.f32.mrb[0].mxu0
        %v245 = vadd.f32 %v173, %v244
        %v246 = vpop.f32.mrb[0].mxu0
        %247 = vdwg.mxu0
        %vm248 = vcmask 785408
        %v249 = vsel %vm248, %v245, 0.0
        %250 = vadd.xlane.f32.xlu0 %v249
        %v251 = vpop.xlane.xlu0 %250
        %v252 = vrcp.pop 96.0
        %v253 = vmul.f32 %v251, %v252
        %v254 = vsub.f32 %v245, %v253
        %v255 = vmul.f32 %v254, %v254
        %v256 = vsel %vm248, %v255, 0.0
        %257 = vadd.xlane.f32.xlu0 %v256
        %v258 = vpop.xlane.xlu0 %257
        %v259 = vmul.f32 %v258, %v252
        %v260 = vadd.f32 %v259, 1e-05
        %v261 = vrsqrt.pop %v260
        %v262 = vmul.f32 %v254, %v261
        %v263 = vlaneseq
        %v264 = vshrl.u32 %v263, 7
        %v265 = vsub.s32 1, %v264
        %v266 = vrot.slane %v169, %v265
        %v267 = vmul.f32 %v262, %v266
        %v268 = vlaneseq
        %v269 = vshrl.u32 %v268, 7
        %v270 = vsub.s32 2, %v269
        %v271 = vrot.slane %v169, %v270
        %v272 = vadd.f32 %v267, %v271
        %273 = vst.msk [vmem:[%s161] sm:$0xff] %vm248, %v272
        %s274 = sand.u32 %s93, 1
        %s275 = scalar_lea.sflag [#allocation3], %s274
        %s276 = sand.u32 %s93, 1
        %s277 = smul.addr %s276, 8
        %s278 = scalar_lea.vmem [#allocation2], %s277
        // Predicated region
        $region33: #{tpu_custom_call.1} parent=31 // pred_check
          %p279 = pneg %p103
        $region34: #{tpu_custom_call.1} parent=31 // pred_check_branch
          %281 = sbr.rel (%p279) target = $region36
        $region35: #{tpu_custom_call.1} parent=31 // pred_region
          %s283 = ssub.s32 128, 128
          %284 = vsyncadd %s275, %s283
          %s285 = smul.addr %s17, 128
          %s286 = scalar_lea.hbm %s3, %s285
          %s288 = sshll.u32 %s278, 4
          %s289 = int_to_ptr.vmem [resolvable:$true] %s288
          %291 = dma.vmem_to_hbm [thread:$0]  %s289, 128, %s286, %s275
        $region36: #{tpu_custom_call.1} parent=31 // pred_fallthru
          _
      $region32: #{tpu_custom_call.1} parent=5 // pred_fallthru
        _
      %p292 = scmp.le.s32.totalorder 2, %s12
      // Predicated region
      $region37: #{tpu_custom_call.1} parent=5 // pred_check
        %p293 = pneg %p292
      $region38: #{tpu_custom_call.1} parent=5 // pred_check_branch
        %295 = sbr.rel (%p293) target = $region40
      $region39: #{tpu_custom_call.1} parent=5 // pred_region
        %s296 = ssub.s32 %s12, 2
        // Predicated region
        $region41: #{tpu_custom_call.1} parent=39 // pred_check
          %p297 = pneg %p109
        $region42: #{tpu_custom_call.1} parent=39 // pred_check_branch
          %299 = sbr.rel (%p297) target = $region44
        $region43: #{tpu_custom_call.1} parent=39 // pred_region
          %s300 = sand.u32 %s94, 1
          %s301 = scalar_lea.sflag [#allocation3], %s300
          %s302 = sand.u32 %s94, 1
          %s303 = smul.addr %s302, 8
          %s304 = scalar_lea.vmem [#allocation2], %s303
          %305 = dma.done %s301, 128
        $region44: #{tpu_custom_call.1} parent=39 // pred_fallthru
          _
      $region40: #{tpu_custom_call.1} parent=5 // pred_fallthru
        _
    $region6: #{tpu_custom_call.1} parent=1 // loop_footer
      %s16 = sadd.s32 1, %s12
    $region7: #{tpu_custom_call.1} parent=1 // loop_footer_branch
      %11 = sbr.rel target = $region3
    $region8: #{tpu_custom_call.1} parent=1 // loop_exit
      _
    %306 = vsyncpa [#allocation3], 1
    %s307 = scalar_lea.sflag [#allocation3], 1
    %308 = vsyncpa %s307, 1

</llo_original>
